<compile_context>
chip_gen: v7x
topology: tpu7x:2x2x1
jax: 0.10.0
libtpu: 0.0.40
codegen_flags: <defaults>
</compile_context>

<pallas_src>
import functools

import jax
import jax.numpy as jnp
from jax import lax
from jax.experimental import pallas as pl
from jax.experimental.pallas import tpu as pltpu


# ----------------------------- helpers --------------------------------------

def _round_up(x, m):
    return (x + m - 1) // m * m


def _pad_to(x, shape):
    pads = [(0, t - s) for s, t in zip(x.shape, shape)]
    if any(p for _, p in pads):
        x = jnp.pad(x, pads)
    return x


def _pick_batch_block(b, cap):
    """Largest divisor of b that is <= cap."""
    cap = min(b, cap)
    for d in range(cap, 0, -1):
        if b % d == 0:
            return d
    return 1


def _pick_label_block(lp, cap):
    """Largest divisor of lp (a multiple of 8) that is <= cap and a multiple of 8,
    or lp itself when lp <= cap."""
    cap = min(lp, max(8, cap))
    if cap == lp:
        return lp
    for d in range(cap, 7, -1):
        if lp % d == 0 and d % 8 == 0:
            return d
    return 8  # 8 always divides lp (lp is padded to a multiple of 8)


# ------------------------------ kernel --------------------------------------

def _lrba_kernel(x1_ref, x2_ref, w1t_ref, w2t_ref, v_ref, c_ref,
                 label_ref, alpha_ref, u1_ref, *, n_real):
    TB, Np, D1p = x1_ref.shape
    _, LB, D2p = x2_ref.shape
    Ap = w1t_ref.shape[1]

    # u1 = x1 @ W1^T, computed once per batch block (the label-chunk grid axis
    # is the inner, sequential axis) and cached in VMEM scratch.
    @pl.when(pl.program_id(1) == 0)
    def _():
        x1_2d = x1_ref[...].reshape(TB * Np, D1p)
        u1 = jnp.dot(x1_2d, w1t_ref[...], preferred_element_type=jnp.float32)
        u1_ref[...] = u1.reshape(TB, Np, Ap)

    # u2 = x2 @ W2^T for this label chunk, as one (TB*LB, D2) @ (D2, A) matmul.
    x2_2d = x2_ref[...].reshape(TB * LB, D2p)
    u2_2d = jnp.dot(x2_2d, w2t_ref[...], preferred_element_type=jnp.float32)

    v_row = v_ref[...]            # (1, Ap): fused Wh^T @ wt^T (rank-1 projection)
    c = c_ref[0, 0]               # fused bias: bh @ wt^T + bt
    n_ids = lax.broadcasted_iota(jnp.int32, (LB, Np), 1)   # hoisted out of loop
    neg_big = jnp.float32(-1e30)

    for b in range(TB):                               # static unroll, small TB
        u1_b = u1_ref[b]                              # (Np, Ap)
        u2_b = u2_2d[b * LB:(b + 1) * LB]             # (LB, Ap)

        # Bilinear interaction + tanh, then the fused rank-1 score projection.
        h = jnp.tanh(u1_b[None, :, :] * u2_b[:, None, :])        # (LB, Np, Ap)
        s = jnp.sum(h * v_row[None, :, :], axis=-1) + c          # (LB, Np)

        # Mask padded pixels, then softmax over pixels.
        s = jnp.where(n_ids < n_real, s, neg_big)
        s = s - jnp.max(s, axis=-1, keepdims=True)
        e = jnp.exp(s)
        inv = pl.reciprocal(jnp.sum(e, axis=-1, keepdims=True), approx=True)
        alpha = e * inv                                           # (LB, Np)

        alpha_ref[b] = alpha
        # label_repr = alpha @ x1  (padded pixels have alpha == 0).
        label_ref[b] = jnp.dot(alpha, x1_ref[b],
                               preferred_element_type=jnp.float32)


# ------------------------------ wrapper -------------------------------------

@jax.jit
def low_rank_bilinear_attention(x1, x2, w1, w2, wh, bh, wt, bt):
    """
    x1: (B, N, dim1) f32, x2: (B, L, dim2) f32
    w1: (A, dim1), w2: (A, dim2), wh: (A, A), bh: (A,), wt: (1, A), bt: (1,)
    (PyTorch nn.Linear weight layout: (out_features, in_features).)
    Returns (label_repr (B, L, dim1), alpha (B, L, N)).
    """
    B, N, D1 = x1.shape
    _, L, D2 = x2.shape
    A = w1.shape[0]

    wh_f = jnp.asarray(wh, jnp.float32)
    wt_f = jnp.asarray(wt, jnp.float32).reshape(A)
    bh_f = jnp.asarray(bh, jnp.float32)
    bt_f = jnp.asarray(bt, jnp.float32)

    # Fuse hidden_linear + target_linear into a rank-1 vector + scalar.
    v_row = (wh_f.T @ wt_f.reshape(A, 1)).reshape(1, A)          # (1, A)
    c = (bh_f @ wt_f + bt_f[0]).reshape(1, 1)                    # (1, 1)

    # Padding: lane dims to multiples of 128, sublane-ish dims to multiples of 8.
    D1p, D2p, Ap = _round_up(D1, 128), _round_up(D2, 128), _round_up(A, 128)
    Np, Lp = _round_up(N, 8), _round_up(L, 8)

    x1p = _pad_to(jnp.asarray(x1, jnp.float32), (B, Np, D1p))
    x2p = _pad_to(jnp.asarray(x2, jnp.float32), (B, Lp, D2p))
    w1t = _pad_to(jnp.asarray(w1, jnp.float32).T, (D1p, Ap))     # (D1p, Ap)
    w2t = _pad_to(jnp.asarray(w2, jnp.float32).T, (D2p, Ap))     # (D2p, Ap)
    v_row = _pad_to(v_row, (1, Ap))

    # Tile selection: batch several examples per step, chunk the label dim, and
    # keep the dominant (TB, LB, Np, Ap) tanh intermediate well inside VMEM.
    TB = _pick_batch_block(B, 8)
    LB = _pick_label_block(Lp, 128)
    while TB * LB * Np * Ap * 4 > (8 << 20):
        if LB > 8:
            LB = _pick_label_block(Lp, LB // 2)
        elif TB > 1:
            TB = _pick_batch_block(B, TB // 2)
        else:
            break

    grid = (B // TB, Lp // LB)

    kernel = functools.partial(_lrba_kernel, n_real=N)

    grid_spec = pltpu.PrefetchScalarGridSpec(
        num_scalar_prefetch=0,
        grid=grid,
        in_specs=[
            pl.BlockSpec((TB, Np, D1p), lambda b, l: (b, 0, 0)),   # x1 (kept across l)
            pl.BlockSpec((TB, LB, D2p), lambda b, l: (b, l, 0)),   # x2 chunk
            pl.BlockSpec((D1p, Ap), lambda b, l: (0, 0)),          # W1^T
            pl.BlockSpec((D2p, Ap), lambda b, l: (0, 0)),          # W2^T
            pl.BlockSpec((1, Ap), lambda b, l: (0, 0)),            # fused v row
            pl.BlockSpec((1, 1), lambda b, l: (0, 0)),             # fused bias c
        ],
        out_specs=[
            pl.BlockSpec((TB, LB, D1p), lambda b, l: (b, l, 0)),   # label_repr
            pl.BlockSpec((TB, LB, Np), lambda b, l: (b, l, 0)),    # alpha
        ],
        scratch_shapes=[pltpu.VMEM((TB, Np, Ap), jnp.float32)],    # cached u1
    )

    # Explicit VMEM budget (headroom under v7x's 64 MiB physical VMEM).
    est_vmem = 4 * (2 * (D1p + D2p) * Ap
                    + 2 * TB * Np * D1p + 2 * TB * LB * D2p
                    + 2 * TB * LB * (D1p + Np)
                    + TB * Np * Ap
                    + 4 * TB * LB * Np * Ap)
    vmem_limit = int(min(max(est_vmem + (8 << 20), 24 << 20), 56 << 20))

    label_p, alpha_p = pl.pallas_call(
        kernel,
        out_shape=(
            jax.ShapeDtypeStruct((B, Lp, D1p), jnp.float32),
            jax.ShapeDtypeStruct((B, Lp, Np), jnp.float32),
        ),
        grid_spec=grid_spec,
        compiler_params=pltpu.CompilerParams(
            # Batch axis is parallel (megacore sharding); the label-chunk axis
            # must stay sequential because the u1 scratch is reused across it.
            dimension_semantics=("parallel", "arbitrary"),
            vmem_limit_bytes=vmem_limit,
        ),
    )(x1p, x2p, w1t, w2t, v_row, c)

    return label_p[:, :L, :D1], alpha_p[:, :L, :N]


# ----------------------------- reference ------------------------------------

def _reference(x1, x2, w1, w2, wh, bh, wt, bt):
    """Pure-JAX mirror of the PyTorch forward for verification."""
    _x1 = jnp.einsum('bnd,ad->bna', x1, w1)                       # (B, N, A)
    _x2 = jnp.einsum('bld,ad->bla', x2, w2)                       # (B, L, A)
    prod = jnp.tanh(_x1[:, None, :, :] * _x2[:, :, None, :])      # (B, L, N, A)
    t = jnp.einsum('blna,ca->blnc', prod, wh) + bh
    t = jnp.einsum('blna,oa->blno', t, wt)[..., 0] + bt[0]        # (B, L, N)
    alpha = jax.nn.softmax(t, axis=-1)
    label = jnp.einsum('bln,bnd->bld', alpha, x1)
    return label, alpha


if __name__ == "__main__":
    # Small, deterministic example shapes.
    B, N, L = 2, 16, 8          # batch, num_pixels, num_labels
    D1, D2, A = 32, 24, 64      # dim1, dim2, att_dim

    key = jax.random.PRNGKey(0)
    ks = jax.random.split(key, 8)
    x1 = jax.random.normal(ks[0], (B, N, D1), jnp.float32)
    x2 = jax.random.normal(ks[1], (B, L, D2), jnp.float32)

    # Deterministic synthetic parameters (PyTorch Linear weight layout: (out, in)).
    w1 = jax.random.normal(ks[2], (A, D1), jnp.float32) * 0.05   # linear1.weight
    w2 = jax.random.normal(ks[3], (A, D2), jnp.float32) * 0.05   # linear2.weight
    wh = jax.random.normal(ks[4], (A, A), jnp.float32) * 0.05    # hidden_linear.weight
    bh = jax.random.normal(ks[5], (A,), jnp.float32) * 0.05      # hidden_linear.bias
    wt = jax.random.normal(ks[6], (1, A), jnp.float32) * 0.05    # target_linear.weight
    bt = jax.random.normal(ks[7], (1,), jnp.float32) * 0.05      # target_linear.bias

    label, alpha = low_rank_bilinear_attention(x1, x2, w1, w2, wh, bh, wt, bt)
    jax.block_until_ready((label, alpha))

    ref_label, ref_alpha = _reference(x1, x2, w1, w2, wh, bh, wt, bt)
    assert label.shape == ref_label.shape and alpha.shape == ref_alpha.shape
    # Tolerances allow for the approximate EUP reciprocal in the softmax
    # normalization and the re-associated (fused) hidden/target projection.
    assert jnp.allclose(alpha, ref_alpha, atol=1e-3, rtol=1e-3), \
        float(jnp.max(jnp.abs(alpha - ref_alpha)))
    assert jnp.allclose(label, ref_label, atol=5e-3, rtol=5e-3), \
        float(jnp.max(jnp.abs(label - ref_label)))

    print("KERNEL_OK")
</pallas_src>

<mosaic_0001>
module attributes {stable_mosaic.version = 11 : i64} {
  func.func @_lrba_kernel(%arg0: i32, %arg1: i32, %arg2: memref<2x16x128xf32, #tpu.memory_space<vmem>>, %arg3: memref<2x8x128xf32, #tpu.memory_space<vmem>>, %arg4: memref<128x128xf32, #tpu.memory_space<vmem>>, %arg5: memref<128x128xf32, #tpu.memory_space<vmem>>, %arg6: memref<1x128xf32, #tpu.memory_space<vmem>>, %arg7: memref<1x1xf32, #tpu.memory_space<vmem>>, %arg8: memref<2x8x128xf32, #tpu.memory_space<vmem>>, %arg9: memref<2x8x16xf32, #tpu.memory_space<vmem>>, %arg10: memref<2x16x128xf32, #tpu.memory_space<vmem>>) attributes {dimension_semantics = [#tpu.dimension_semantics<parallel>, #tpu.dimension_semantics<arbitrary>], iteration_bounds = array<i64: 1, 1>, scalar_prefetch = 0 : i64, scratch_operands = 1 : i64, tpu.core_type = #tpu.core_type<tc>, window_params = [{transform_indices = @transform_0, window_bounds = array<i64: 2, 16, 128>}, {transform_indices = @transform_1, window_bounds = array<i64: 2, 8, 128>}, {pipeline_mode = #tpu.pipeline_mode<synchronous>, transform_indices = @transform_2, window_bounds = array<i64: 128, 128>}, {pipeline_mode = #tpu.pipeline_mode<synchronous>, transform_indices = @transform_3, window_bounds = array<i64: 128, 128>}, {pipeline_mode = #tpu.pipeline_mode<synchronous>, transform_indices = @transform_4, window_bounds = array<i64: 1, 128>}, {pipeline_mode = #tpu.pipeline_mode<synchronous>, transform_indices = @transform_5, window_bounds = array<i64: 1, 1>}, {transform_indices = @transform_6, window_bounds = array<i64: 2, 8, 128>}, {transform_indices = @transform_7, window_bounds = array<i64: 2, 8, 16>}]} {
    %c0_i32 = arith.constant 0 : i32
    %0 = arith.cmpi eq, %arg1, %c0_i32 : i32
    %1 = arith.extui %0 : i1 to i32
    %c0_i32_0 = arith.constant 0 : i32
    %2 = arith.cmpi ne, %1, %c0_i32_0 : i32
    scf.if %2 {
      %c0_43 = arith.constant 0 : index
      %c0_44 = arith.constant 0 : index
      %c0_45 = arith.constant 0 : index
      %87 = vector.load %arg2[%c0_43, %c0_44, %c0_45] : memref<2x16x128xf32, #tpu.memory_space<vmem>>, vector<2x16x128xf32>
      %88 = vector.shape_cast %87 : vector<2x16x128xf32> to vector<32x128xf32>
      %c0_46 = arith.constant 0 : index
      %c0_47 = arith.constant 0 : index
      %89 = vector.load %arg4[%c0_46, %c0_47] : memref<128x128xf32, #tpu.memory_space<vmem>>, vector<128x128xf32>
      %cst_48 = arith.constant dense<0.000000e+00> : vector<32x128xf32>
      %90 = tpu.matmul %88, %89, %cst_48 {dimension_numbers = #tpu.dot_dimension_numbers<[1], [0], [0], [1], [0, 0, 1, 1], [], []>} : vector<32x128xf32>, vector<128x128xf32>, vector<32x128xf32> -> vector<32x128xf32>
      %91 = vector.shape_cast %90 : vector<32x128xf32> to vector<2x16x128xf32>
      %c0_49 = arith.constant 0 : index
      %c0_50 = arith.constant 0 : index
      %c0_51 = arith.constant 0 : index
      %92 = vector.load %arg10[%c0_49, %c0_50, %c0_51] : memref<2x16x128xf32, #tpu.memory_space<vmem>>, vector<2x16x128xf32>
      tpu.vector_store %arg10[%c0_49, %c0_50, %c0_51], %91 {strides = array<i32>} : memref<2x16x128xf32, #tpu.memory_space<vmem>>, vector<2x16x128xf32>,
    } else {
    }
    %c0 = arith.constant 0 : index
    %c0_1 = arith.constant 0 : index
    %c0_2 = arith.constant 0 : index
    %3 = vector.load %arg3[%c0, %c0_1, %c0_2] : memref<2x8x128xf32, #tpu.memory_space<vmem>>, vector<2x8x128xf32>
    %4 = vector.shape_cast %3 : vector<2x8x128xf32> to vector<16x128xf32>
    %c0_3 = arith.constant 0 : index
    %c0_4 = arith.constant 0 : index
    %5 = vector.load %arg5[%c0_3, %c0_4] : memref<128x128xf32, #tpu.memory_space<vmem>>, vector<128x128xf32>
    %cst = arith.constant dense<0.000000e+00> : vector<16x128xf32>
    %6 = tpu.matmul %4, %5, %cst {dimension_numbers = #tpu.dot_dimension_numbers<[1], [0], [0], [1], [0, 0, 1, 1], [], []>} : vector<16x128xf32>, vector<128x128xf32>, vector<16x128xf32> -> vector<16x128xf32>
    %c0_5 = arith.constant 0 : index
    %c0_6 = arith.constant 0 : index
    %7 = vector.load %arg6[%c0_5, %c0_6] : memref<1x128xf32, #tpu.memory_space<vmem>>, vector<1x128xf32>
    %c0_7 = arith.constant 0 : index
    %c0_8 = arith.constant 0 : index
    %8 = vector.load %arg7[%c0_7, %c0_8] : memref<1x1xf32, #tpu.memory_space<vmem>>, vector<1x1xf32>
    %9 = vector.extract %8[0, 0] : f32 from vector<1x1xf32>
    %10 = tpu.iota {dimensions = array<i32: 1>} : vector<8x16xi32>
    %c0_9 = arith.constant 0 : index
    %c0_10 = arith.constant 0 : index
    %c0_11 = arith.constant 0 : index
    %11 = vector.load %arg10[%c0_9, %c0_10, %c0_11] : memref<2x16x128xf32, #tpu.memory_space<vmem>>, vector<1x16x128xf32>
    %12 = vector.shape_cast %11 : vector<1x16x128xf32> to vector<16x128xf32>
    %13 = vector.extract_strided_slice %6 {offsets = [0, 0], sizes = [8, 128], strides = [1, 1]} : vector<16x128xf32> to vector<8x128xf32>
    %14 = vector.shape_cast %12 : vector<16x128xf32> to vector<1x16x128xf32>
    %15 = vector.shape_cast %13 : vector<8x128xf32> to vector<8x1x128xf32>
    %16 = vector.broadcast %14 : vector<1x16x128xf32> to vector<8x16x128xf32>
    %17 = vector.broadcast %15 : vector<8x1x128xf32> to vector<8x16x128xf32>
    %18 = arith.mulf %16, %17 : vector<8x16x128xf32>
    %19 = math.tanh %18 : vector<8x16x128xf32>
    %20 = vector.shape_cast %7 : vector<1x128xf32> to vector<1x1x128xf32>
    %21 = vector.broadcast %20 : vector<1x1x128xf32> to vector<8x16x128xf32>
    %22 = arith.mulf %19, %21 : vector<8x16x128xf32>
    %cst_12 = arith.constant dense<0.000000e+00> : vector<8x16xf32>
    %23 = vector.multi_reduction <add>, %22, %cst_12 [2] : vector<8x16x128xf32> to vector<8x16xf32>
    %24 = vector.broadcast %9 : f32 to vector<8x16xf32>
    %25 = arith.addf %23, %24 : vector<8x16xf32>
    %c16_i32 = arith.constant 16 : i32
    %26 = vector.broadcast %c16_i32 : i32 to vector<8x16xi32>
    %27 = arith.cmpi slt, %10, %26 : vector<8x16xi32>
    %cst_13 = arith.constant -1.000000e+30 : f32
    %28 = vector.broadcast %cst_13 : f32 to vector<8x16xf32>
    %29 = arith.select %27, %25, %28 : vector<8x16xi1>, vector<8x16xf32>
    %cst_14 = arith.constant dense<0xFF800000> : vector<8xf32>
    %30 = vector.multi_reduction <maximumf>, %29, %cst_14 [1] : vector<8x16xf32> to vector<8xf32>
    %31 = vector.shape_cast %30 : vector<8xf32> to vector<8x1xf32>
    %32 = vector.broadcast %31 : vector<8x1xf32> to vector<8x16xf32>
    %33 = arith.subf %29, %32 : vector<8x16xf32>
    %34 = math.exp %33 : vector<8x16xf32>
    %cst_15 = arith.constant dense<0.000000e+00> : vector<8xf32>
    %35 = vector.multi_reduction <add>, %34, %cst_15 [1] : vector<8x16xf32> to vector<8xf32>
    %36 = vector.shape_cast %35 : vector<8xf32> to vector<8x1xf32>
    %37 = tpu.reciprocal %36 {approx = true} : vector<8x1xf32> -> vector<8x1xf32>
    %38 = vector.broadcast %37 : vector<8x1xf32> to vector<8x16xf32>
    %39 = arith.mulf %34, %38 : vector<8x16xf32>
    %c0_16 = arith.constant 0 : index
    %c0_17 = arith.constant 0 : index
    %c0_18 = arith.constant 0 : index
    %40 = vector.load %arg9[%c0_16, %c0_17, %c0_18] : memref<2x8x16xf32, #tpu.memory_space<vmem>>, vector<1x8x16xf32>
    %41 = vector.shape_cast %40 : vector<1x8x16xf32> to vector<8x16xf32>
    %42 = vector.shape_cast %39 : vector<8x16xf32> to vector<1x8x16xf32>
    tpu.vector_store %arg9[%c0_16, %c0_17, %c0_18], %42 {strides = array<i32>} : memref<2x8x16xf32, #tpu.memory_space<vmem>>, vector<1x8x16xf32>,
    %c0_19 = arith.constant 0 : index
    %c0_20 = arith.constant 0 : index
    %c0_21 = arith.constant 0 : index
    %43 = vector.load %arg2[%c0_19, %c0_20, %c0_21] : memref<2x16x128xf32, #tpu.memory_space<vmem>>, vector<1x16x128xf32>
    %44 = vector.shape_cast %43 : vector<1x16x128xf32> to vector<16x128xf32>
    %cst_22 = arith.constant dense<0.000000e+00> : vector<8x128xf32>
    %45 = tpu.matmul %39, %44, %cst_22 {dimension_numbers = #tpu.dot_dimension_numbers<[1], [0], [0], [1], [0, 0, 1, 1], [], []>} : vector<8x16xf32>, vector<16x128xf32>, vector<8x128xf32> -> vector<8x128xf32>
    %c0_23 = arith.constant 0 : index
    %c0_24 = arith.constant 0 : index
    %c0_25 = arith.constant 0 : index
    %46 = vector.load %arg8[%c0_23, %c0_24, %c0_25] : memref<2x8x128xf32, #tpu.memory_space<vmem>>, vector<1x8x128xf32>
    %47 = vector.shape_cast %46 : vector<1x8x128xf32> to vector<8x128xf32>
    %48 = vector.shape_cast %45 : vector<8x128xf32> to vector<1x8x128xf32>
    tpu.vector_store %arg8[%c0_23, %c0_24, %c0_25], %48 {strides = array<i32>} : memref<2x8x128xf32, #tpu.memory_space<vmem>>, vector<1x8x128xf32>,
    %c1 = arith.constant 1 : index
    %c0_26 = arith.constant 0 : index
    %c0_27 = arith.constant 0 : index
    %49 = vector.load %arg10[%c1, %c0_26, %c0_27] : memref<2x16x128xf32, #tpu.memory_space<vmem>>, vector<1x16x128xf32>
    %50 = vector.shape_cast %49 : vector<1x16x128xf32> to vector<16x128xf32>
    %51 = vector.extract_strided_slice %6 {offsets = [8, 0], sizes = [8, 128], strides = [1, 1]} : vector<16x128xf32> to vector<8x128xf32>
    %52 = vector.shape_cast %50 : vector<16x128xf32> to vector<1x16x128xf32>
    %53 = vector.shape_cast %51 : vector<8x128xf32> to vector<8x1x128xf32>
    %54 = vector.broadcast %52 : vector<1x16x128xf32> to vector<8x16x128xf32>
    %55 = vector.broadcast %53 : vector<8x1x128xf32> to vector<8x16x128xf32>
    %56 = arith.mulf %54, %55 : vector<8x16x128xf32>
    %57 = math.tanh %56 : vector<8x16x128xf32>
    %58 = vector.shape_cast %7 : vector<1x128xf32> to vector<1x1x128xf32>
    %59 = vector.broadcast %58 : vector<1x1x128xf32> to vector<8x16x128xf32>
    %60 = arith.mulf %57, %59 : vector<8x16x128xf32>
    %cst_28 = arith.constant dense<0.000000e+00> : vector<8x16xf32>
    %61 = vector.multi_reduction <add>, %60, %cst_28 [2] : vector<8x16x128xf32> to vector<8x16xf32>
    %62 = vector.broadcast %9 : f32 to vector<8x16xf32>
    %63 = arith.addf %61, %62 : vector<8x16xf32>
    %c16_i32_29 = arith.constant 16 : i32
    %64 = vector.broadcast %c16_i32_29 : i32 to vector<8x16xi32>
    %65 = arith.cmpi slt, %10, %64 : vector<8x16xi32>
    %cst_30 = arith.constant -1.000000e+30 : f32
    %66 = vector.broadcast %cst_30 : f32 to vector<8x16xf32>
    %67 = arith.select %65, %63, %66 : vector<8x16xi1>, vector<8x16xf32>
    %cst_31 = arith.constant dense<0xFF800000> : vector<8xf32>
    %68 = vector.multi_reduction <maximumf>, %67, %cst_31 [1] : vector<8x16xf32> to vector<8xf32>
    %69 = vector.shape_cast %68 : vector<8xf32> to vector<8x1xf32>
    %70 = vector.broadcast %69 : vector<8x1xf32> to vector<8x16xf32>
    %71 = arith.subf %67, %70 : vector<8x16xf32>
    %72 = math.exp %71 : vector<8x16xf32>
    %cst_32 = arith.constant dense<0.000000e+00> : vector<8xf32>
    %73 = vector.multi_reduction <add>, %72, %cst_32 [1] : vector<8x16xf32> to vector<8xf32>
    %74 = vector.shape_cast %73 : vector<8xf32> to vector<8x1xf32>
    %75 = tpu.reciprocal %74 {approx = true} : vector<8x1xf32> -> vector<8x1xf32>
    %76 = vector.broadcast %75 : vector<8x1xf32> to vector<8x16xf32>
    %77 = arith.mulf %72, %76 : vector<8x16xf32>
    %c1_33 = arith.constant 1 : index
    %c0_34 = arith.constant 0 : index
    %c0_35 = arith.constant 0 : index
    %78 = vector.load %arg9[%c1_33, %c0_34, %c0_35] : memref<2x8x16xf32, #tpu.memory_space<vmem>>, vector<1x8x16xf32>
    %79 = vector.shape_cast %78 : vector<1x8x16xf32> to vector<8x16xf32>
    %80 = vector.shape_cast %77 : vector<8x16xf32> to vector<1x8x16xf32>
    tpu.vector_store %arg9[%c1_33, %c0_34, %c0_35], %80 {strides = array<i32>} : memref<2x8x16xf32, #tpu.memory_space<vmem>>, vector<1x8x16xf32>,
    %c1_36 = arith.constant 1 : index
    %c0_37 = arith.constant 0 : index
    %c0_38 = arith.constant 0 : index
    %81 = vector.load %arg2[%c1_36, %c0_37, %c0_38] : memref<2x16x128xf32, #tpu.memory_space<vmem>>, vector<1x16x128xf32>
    %82 = vector.shape_cast %81 : vector<1x16x128xf32> to vector<16x128xf32>
    %cst_39 = arith.constant dense<0.000000e+00> : vector<8x128xf32>
    %83 = tpu.matmul %77, %82, %cst_39 {dimension_numbers = #tpu.dot_dimension_numbers<[1], [0], [0], [1], [0, 0, 1, 1], [], []>} : vector<8x16xf32>, vector<16x128xf32>, vector<8x128xf32> -> vector<8x128xf32>
    %c1_40 = arith.constant 1 : index
    %c0_41 = arith.constant 0 : index
    %c0_42 = arith.constant 0 : index
    %84 = vector.load %arg8[%c1_40, %c0_41, %c0_42] : memref<2x8x128xf32, #tpu.memory_space<vmem>>, vector<1x8x128xf32>
    %85 = vector.shape_cast %84 : vector<1x8x128xf32> to vector<8x128xf32>
    %86 = vector.shape_cast %83 : vector<8x128xf32> to vector<1x8x128xf32>
    tpu.vector_store %arg8[%c1_40, %c0_41, %c0_42], %86 {strides = array<i32>} : memref<2x8x128xf32, #tpu.memory_space<vmem>>, vector<1x8x128xf32>,
    return
  }
  func.func @transform_0(%arg0: i32, %arg1: i32) -> (i32, i32, i32) {
    %c0_i32 = arith.constant 0 : i32
    %c0_i32_0 = arith.constant 0 : i32
    %c0_i32_1 = arith.constant 0 : i32
    return %arg0, %c0_i32, %c0_i32_0 : i32, i32, i32
  }
  func.func @transform_1(%arg0: i32, %arg1: i32) -> (i32, i32, i32) {
    %c0_i32 = arith.constant 0 : i32
    %c0_i32_0 = arith.constant 0 : i32
    return %arg0, %arg1, %c0_i32 : i32, i32, i32
  }
  func.func @transform_2(%arg0: i32, %arg1: i32) -> (i32, i32) {
    %c0_i32 = arith.constant 0 : i32
    %c0_i32_0 = arith.constant 0 : i32
    %c0_i32_1 = arith.constant 0 : i32
    return %c0_i32, %c0_i32_0 : i32, i32
  }
  func.func @transform_3(%arg0: i32, %arg1: i32) -> (i32, i32) {
    %c0_i32 = arith.constant 0 : i32
    %c0_i32_0 = arith.constant 0 : i32
    %c0_i32_1 = arith.constant 0 : i32
    return %c0_i32, %c0_i32_0 : i32, i32
  }
  func.func @transform_4(%arg0: i32, %arg1: i32) -> (i32, i32) {
    %c0_i32 = arith.constant 0 : i32
    %c0_i32_0 = arith.constant 0 : i32
    %c0_i32_1 = arith.constant 0 : i32
    return %c0_i32, %c0_i32_0 : i32, i32
  }
  func.func @transform_5(%arg0: i32, %arg1: i32) -> (i32, i32) {
    %c0_i32 = arith.constant 0 : i32
    %c0_i32_0 = arith.constant 0 : i32
    %c0_i32_1 = arith.constant 0 : i32
    return %c0_i32, %c0_i32_0 : i32, i32
  }
  func.func @transform_6(%arg0: i32, %arg1: i32) -> (i32, i32, i32) {
    %c0_i32 = arith.constant 0 : i32
    %c0_i32_0 = arith.constant 0 : i32
    return %arg0, %arg1, %c0_i32 : i32, i32, i32
  }
  func.func @transform_7(%arg0: i32, %arg1: i32) -> (i32, i32, i32) {
    %c0_i32 = arith.constant 0 : i32
    %c0_i32_0 = arith.constant 0 : i32
    return %arg0, %arg1, %c0_i32 : i32, i32, i32
  }
}

</mosaic_0001>

<llo_original>
// kernel: low_rank_bilinear_attention.1
$region0: #{low_rank_bilinear_attention.1}
  #allocation0 [shape = 'u32[]', space=smem, size = 0x4, offset = 0x4, fixed_abs, tag = 'smem constant byte address 0x4 - core index']
  #allocation1 [shape = 'u32[144,128]{1,0:T(1,128)}', space=vmem, size = 0x12000, scoped, tag = 'internal scratch']
  #allocation2 [shape = 'f32[2,16,128]{2,1,0:T(8,128)}', space=vmem, size = 0x4000, scoped, tag = 'scratch operand']
  #allocation3 [shape = 'f32[1,1]{1,0:T(1,128)S(1)}', space=vmem, size = 0x200, scoped, tag = 'scoped memory for low_rank_bilinear_attention.1']
  %s0 = inlined_call_operand.vmem [shape: f32[2,16,128], index: 0, kind: input, shape index: {}]
  %s1 = inlined_call_operand.vmem [shape: f32[2,8,128], index: 1, kind: input, shape index: {}]
  %s2 = inlined_call_operand.vmem [shape: f32[128,128], index: 2, kind: input, shape index: {}]
  %s3 = inlined_call_operand.vmem [shape: f32[128,128], index: 3, kind: input, shape index: {}]
  %s4 = inlined_call_operand.vmem [shape: f32[1,128], index: 4, kind: input, shape index: {}]
  %s5 = inlined_call_operand.<no memory space> [shape: f32[1,1], index: 5, kind: input, shape index: {}]
  %s6 = inlined_call_operand.hbm [shape: f32[2,8,128], index: 6, kind: output, shape index: {0}]
  %s7 = inlined_call_operand.hbm [shape: f32[2,8,16], index: 7, kind: output, shape index: {1}]
  %8 = xla_tuple %s6, %s7
  %s9 = sld [smem:[#allocation0]]
  $region46: #{low_rank_bilinear_attention.1} parent=0
    _
  %s11 = ssub.s32 1, %s9
  %s12 = scalar_select 0, %s11, %s9
  %v13 = vstv %s5
  %14 = vst [vmem:[#allocation3] sm:$0x1] %v13
  $region1: #{low_rank_bilinear_attention.1} parent=0
    #allocation4 [shape = 'u8[8192]{0}', space=vmem, size = 0x2000, scoped, tag = 'output window, operand 0, single buffered']
    #allocation5 [shape = 's32[1]{0}', space=sflag, size = 0x4, scoped, tag = 'scoped memory for low_rank_bilinear_attention.1']
    #allocation6 [shape = 'u8[8192]{0}', space=vmem, size = 0x2000, scoped, tag = 'output window, operand 1, single buffered']
    #allocation7 [shape = 's32[1]{0}', space=sflag, size = 0x4, scoped, tag = 'scoped memory for low_rank_bilinear_attention.1']
    %15 = vsyncpa [#allocation5], 0
    %16 = vsyncpa [#allocation7], 0
    // Predicated region
    $region2: #{low_rank_bilinear_attention.1} parent=1 // pred_check
      _
    $region3: #{low_rank_bilinear_attention.1} parent=1 // pred_check_branch
      %18 = sbr.rel (0) target = $region5
    $region4: #{low_rank_bilinear_attention.1} parent=1 // pred_region
      _
    $region5: #{low_rank_bilinear_attention.1} parent=1 // pred_fallthru
      _
    // Predicated region
    $region6: #{low_rank_bilinear_attention.1} parent=1 // pred_check
      _
    $region7: #{low_rank_bilinear_attention.1} parent=1 // pred_check_branch
      %20 = sbr.rel (0) target = $region9
    $region8: #{low_rank_bilinear_attention.1} parent=1 // pred_region
      _
    $region9: #{low_rank_bilinear_attention.1} parent=1 // pred_fallthru
      _
    // Predicated region
    $region10: #{low_rank_bilinear_attention.1} parent=1 // pred_check
      _
    $region11: #{low_rank_bilinear_attention.1} parent=1 // pred_check_branch
      %22 = sbr.rel (0) target = $region13
    $region12: #{low_rank_bilinear_attention.1} parent=1 // pred_region
      _
    $region13: #{low_rank_bilinear_attention.1} parent=1 // pred_fallthru
      _
    // Predicated region
    $region14: #{low_rank_bilinear_attention.1} parent=1 // pred_check
      _
    $region15: #{low_rank_bilinear_attention.1} parent=1 // pred_check_branch
      %24 = sbr.rel (0) target = $region17
    $region16: #{low_rank_bilinear_attention.1} parent=1 // pred_region
      _
    $region17: #{low_rank_bilinear_attention.1} parent=1 // pred_fallthru
      _
    // Predicated region
    $region18: #{low_rank_bilinear_attention.1} parent=1 // pred_check
      _
    $region19: #{low_rank_bilinear_attention.1} parent=1 // pred_check_branch
      %26 = sbr.rel (0) target = $region21
    $region20: #{low_rank_bilinear_attention.1} parent=1 // pred_region
      _
    $region21: #{low_rank_bilinear_attention.1} parent=1 // pred_fallthru
      _
    // Predicated region
    $region22: #{low_rank_bilinear_attention.1} parent=1 // pred_check
      _
    $region23: #{low_rank_bilinear_attention.1} parent=1 // pred_check_branch
      %28 = sbr.rel (0) target = $region25
    $region24: #{low_rank_bilinear_attention.1} parent=1 // pred_region
      _
    $region25: #{low_rank_bilinear_attention.1} parent=1 // pred_fallthru
      _
    %p29 = scmp.eq.s32.totalorder 0, 0
    // Predicated region
    $region26: #{low_rank_bilinear_attention.1} parent=1 // pred_check
      %p30 = pneg %p29
    $region27: #{low_rank_bilinear_attention.1} parent=1 // pred_check_branch
      %32 = sbr.rel (%p30) target = $region29
    $region28: #{low_rank_bilinear_attention.1} parent=1 // pred_region
      %v33 = vld [vmem:[%s0] sm:$0xff]
      %v34 = vld [vmem:[%s0 + $0x8] sm:$0xff]
      %v35 = vld [vmem:[%s0 + $0x10] sm:$0xff]
      %v36 = vld [vmem:[%s0 + $0x18] sm:$0xff]
      %v37 = vld [vmem:[%s2] sm:$0xff]
      %v38 = vld [vmem:[%s2 + $0x8] sm:$0xff]
      %v39 = vld [vmem:[%s2 + $0x10] sm:$0xff]
      %v40 = vld [vmem:[%s2 + $0x18] sm:$0xff]
      %v41 = vld [vmem:[%s2 + $0x20] sm:$0xff]
      %v42 = vld [vmem:[%s2 + $0x28] sm:$0xff]
      %v43 = vld [vmem:[%s2 + $0x30] sm:$0xff]
      %v44 = vld [vmem:[%s2 + $0x38] sm:$0xff]
      %v45 = vld [vmem:[%s2 + $0x40] sm:$0xff]
      %v46 = vld [vmem:[%s2 + $0x48] sm:$0xff]
      %v47 = vld [vmem:[%s2 + $0x50] sm:$0xff]
      %v48 = vld [vmem:[%s2 + $0x58] sm:$0xff]
      %v49 = vld [vmem:[%s2 + $0x60] sm:$0xff]
      %v50 = vld [vmem:[%s2 + $0x68] sm:$0xff]
      %v51 = vld [vmem:[%s2 + $0x70] sm:$0xff]
      %v52 = vld [vmem:[%s2 + $0x78] sm:$0xff]
      %53 = vmatprep.subr.mxu0 0.0
      %54 = vmatpush1.msra.mxu0 %v37
      %55 = vmatprep.subr.mxu0 0.0
      %56 = vmatpush1.msra.mxu0 %v38
      %57 = vmatprep.subr.mxu0 0.0
      %58 = vmatpush1.msra.mxu0 %v39
      %59 = vmatprep.subr.mxu0 0.0
      %60 = vmatpush1.msra.mxu0 %v40
      %61 = vmatprep.subr.mxu0 0.0
      %62 = vmatpush1.msra.mxu0 %v41
      %63 = vmatprep.subr.mxu0 0.0
      %64 = vmatpush1.msra.mxu0 %v42
      %65 = vmatprep.subr.mxu0 0.0
      %66 = vmatpush1.msra.mxu0 %v43
      %67 = vmatprep.subr.mxu0 0.0
      %68 = vmatpush1.msra.mxu0 %v44
      %69 = vmatprep.subr.mxu0 0.0
      %70 = vmatpush1.msra.mxu0 %v45
      %71 = vmatprep.subr.mxu0 0.0
      %72 = vmatpush1.msra.mxu0 %v46
      %73 = vmatprep.subr.mxu0 0.0
      %74 = vmatpush1.msra.mxu0 %v47
      %75 = vmatprep.subr.mxu0 0.0
      %76 = vmatpush1.msra.mxu0 %v48
      %77 = vmatprep.subr.mxu0 0.0
      %78 = vmatpush1.msra.mxu0 %v49
      %79 = vmatprep.subr.mxu0 0.0
      %80 = vmatpush1.msra.mxu0 %v50
      %81 = vmatprep.subr.mxu0 0.0
      %82 = vmatpush1.msra.mxu0 %v51
      %83 = vmatprep.subr.mxu0 0.0
      %84 = vmatpush1.msra.mxu0 %v52
      %85 = vmatprep.subr.mxu0 0.0
      %86 = vmatpush1.msra.mxu0 0.0
      %87 = vmatprep.subr.mxu0 0.0
      %88 = vmatpush1.msra.mxu0 0.0
      %89 = vmatprep.subr.mxu0 0.0
      %90 = vmatpush1.msra.mxu0 0.0
      %91 = vmatprep.subr.mxu0 0.0
      %92 = vmatpush1.msra.mxu0 0.0
      %93 = vmatprep.subr.mxu0 0.0
      %94 = vmatpush1.msra.mxu0 0.0
      %95 = vmatprep.subr.mxu0 0.0
      %96 = vmatpush1.msra.mxu0 0.0
      %97 = vmatprep.subr.mxu0 0.0
      %98 = vmatpush1.msra.mxu0 0.0
      %99 = vmatprep.subr.mxu0 0.0
      %100 = vmatpush1.msra.mxu0 0.0
      %101 = vmatprep.subr.mxu0 0.0
      %102 = vmatpush1.msra.mxu0 0.0
      %103 = vmatprep.subr.mxu0 0.0
      %104 = vmatpush1.msra.mxu0 0.0
      %105 = vmatprep.subr.mxu0 0.0
      %106 = vmatpush1.msra.mxu0 0.0
      %107 = vmatprep.subr.mxu0 0.0
      %108 = vmatpush1.msra.mxu0 0.0
      %109 = vmatprep.subr.mxu0 0.0
      %110 = vmatpush1.msra.mxu0 0.0
      %111 = vmatprep.subr.mxu0 0.0
      %112 = vmatpush1.msra.mxu0 0.0
      %113 = vmatprep.subr.mxu0 0.0
      %114 = vmatpush1.msra.mxu0 0.0
      %115 = vmatprep.subr.mxu0 0.0
      %116 = vmatpush1.msra.mxu0 0.0
      %117 = vmatprep.mubr.f32.mxu0 0.0
      %118 = vmatmul.mubr.f32.gmra.mrb[0].mxu0 %v33
      %v119 = vpop.f32.mrb[0].mxu0
      %v120 = vadd.f32 0.0, %v119
      %v121 = vpop.f32.mrb[0].mxu0
      %122 = vmatprep.mubr.f32.mxu0 0.0
      %123 = vmatmul.mubr.f32.gmra.mrb[0].mxu0 %v34
      %v124 = vpop.f32.mrb[0].mxu0
      %v125 = vadd.f32 0.0, %v124
      %v126 = vpop.f32.mrb[0].mxu0
      %127 = vmatprep.mubr.f32.mxu0 0.0
      %128 = vmatmul.mubr.f32.gmra.mrb[0].mxu0 %v35
      %v129 = vpop.f32.mrb[0].mxu0
      %v130 = vadd.f32 0.0, %v129
      %v131 = vpop.f32.mrb[0].mxu0
      %132 = vmatprep.mubr.f32.mxu0 0.0
      %133 = vmatmul.mubr.f32.gmra.mrb[0].mxu0 %v36
      %v134 = vpop.f32.mrb[0].mxu0
      %v135 = vadd.f32 0.0, %v134
      %v136 = vpop.f32.mrb[0].mxu0
      %137 = vdwg.mxu0
      %138 = vst [vmem:[#allocation2] sm:$0xff] %v120
      %139 = vst [vmem:[#allocation2 + $0x8] sm:$0xff] %v125
      %140 = vst [vmem:[#allocation2 + $0x10] sm:$0xff] %v130
      %141 = vst [vmem:[#allocation2 + $0x18] sm:$0xff] %v135
    $region29: #{low_rank_bilinear_attention.1} parent=1 // pred_fallthru
      _
    %v142 = vld [vmem:[%s1] sm:$0xff]
    %v143 = vld [vmem:[%s1 + $0x8] sm:$0xff]
    %v144 = vld [vmem:[%s3] sm:$0xff]
    %v145 = vld [vmem:[%s3 + $0x8] sm:$0xff]
    %v146 = vld [vmem:[%s3 + $0x10] sm:$0xff]
    %v147 = vld [vmem:[%s3 + $0x18] sm:$0xff]
    %v148 = vld [vmem:[%s3 + $0x20] sm:$0xff]
    %v149 = vld [vmem:[%s3 + $0x28] sm:$0xff]
    %v150 = vld [vmem:[%s3 + $0x30] sm:$0xff]
    %v151 = vld [vmem:[%s3 + $0x38] sm:$0xff]
    %v152 = vld [vmem:[%s3 + $0x40] sm:$0xff]
    %v153 = vld [vmem:[%s3 + $0x48] sm:$0xff]
    %v154 = vld [vmem:[%s3 + $0x50] sm:$0xff]
    %v155 = vld [vmem:[%s3 + $0x58] sm:$0xff]
    %v156 = vld [vmem:[%s3 + $0x60] sm:$0xff]
    %v157 = vld [vmem:[%s3 + $0x68] sm:$0xff]
    %v158 = vld [vmem:[%s3 + $0x70] sm:$0xff]
    %v159 = vld [vmem:[%s3 + $0x78] sm:$0xff]
    %160 = vmatprep.subr.mxu0 0.0
    %161 = vmatpush1.msra.mxu0 %v144
    %162 = vmatprep.subr.mxu0 0.0
    %163 = vmatpush1.msra.mxu0 %v145
    %164 = vmatprep.subr.mxu0 0.0
    %165 = vmatpush1.msra.mxu0 %v146
    %166 = vmatprep.subr.mxu0 0.0
    %167 = vmatpush1.msra.mxu0 %v147
    %168 = vmatprep.subr.mxu0 0.0
    %169 = vmatpush1.msra.mxu0 %v148
    %170 = vmatprep.subr.mxu0 0.0
    %171 = vmatpush1.msra.mxu0 %v149
    %172 = vmatprep.subr.mxu0 0.0
    %173 = vmatpush1.msra.mxu0 %v150
    %174 = vmatprep.subr.mxu0 0.0
    %175 = vmatpush1.msra.mxu0 %v151
    %176 = vmatprep.subr.mxu0 0.0
    %177 = vmatpush1.msra.mxu0 %v152
    %178 = vmatprep.subr.mxu0 0.0
    %179 = vmatpush1.msra.mxu0 %v153
    %180 = vmatprep.subr.mxu0 0.0
    %181 = vmatpush1.msra.mxu0 %v154
    %182 = vmatprep.subr.mxu0 0.0
    %183 = vmatpush1.msra.mxu0 %v155
    %184 = vmatprep.subr.mxu0 0.0
    %185 = vmatpush1.msra.mxu0 %v156
    %186 = vmatprep.subr.mxu0 0.0
    %187 = vmatpush1.msra.mxu0 %v157
    %188 = vmatprep.subr.mxu0 0.0
    %189 = vmatpush1.msra.mxu0 %v158
    %190 = vmatprep.subr.mxu0 0.0
    %191 = vmatpush1.msra.mxu0 %v159
    %192 = vmatprep.subr.mxu0 0.0
    %193 = vmatpush1.msra.mxu0 0.0
    %194 = vmatprep.subr.mxu0 0.0
    %195 = vmatpush1.msra.mxu0 0.0
    %196 = vmatprep.subr.mxu0 0.0
    %197 = vmatpush1.msra.mxu0 0.0
    %198 = vmatprep.subr.mxu0 0.0
    %199 = vmatpush1.msra.mxu0 0.0
    %200 = vmatprep.subr.mxu0 0.0
    %201 = vmatpush1.msra.mxu0 0.0
    %202 = vmatprep.subr.mxu0 0.0
    %203 = vmatpush1.msra.mxu0 0.0
    %204 = vmatprep.subr.mxu0 0.0
    %205 = vmatpush1.msra.mxu0 0.0
    %206 = vmatprep.subr.mxu0 0.0
    %207 = vmatpush1.msra.mxu0 0.0
    %208 = vmatprep.subr.mxu0 0.0
    %209 = vmatpush1.msra.mxu0 0.0
    %210 = vmatprep.subr.mxu0 0.0
    %211 = vmatpush1.msra.mxu0 0.0
    %212 = vmatprep.subr.mxu0 0.0
    %213 = vmatpush1.msra.mxu0 0.0
    %214 = vmatprep.subr.mxu0 0.0
    %215 = vmatpush1.msra.mxu0 0.0
    %216 = vmatprep.subr.mxu0 0.0
    %217 = vmatpush1.msra.mxu0 0.0
    %218 = vmatprep.subr.mxu0 0.0
    %219 = vmatpush1.msra.mxu0 0.0
    %220 = vmatprep.subr.mxu0 0.0
    %221 = vmatpush1.msra.mxu0 0.0
    %222 = vmatprep.subr.mxu0 0.0
    %223 = vmatpush1.msra.mxu0 0.0
    %224 = vmatprep.mubr.f32.mxu0 0.0
    %225 = vmatmul.mubr.f32.gmra.mrb[0].mxu0 %v142
    %v226 = vpop.f32.mrb[0].mxu0
    %v227 = vadd.f32 0.0, %v226
    %v228 = vpop.f32.mrb[0].mxu0
    %229 = vmatprep.mubr.f32.mxu0 0.0
    %230 = vmatmul.mubr.f32.gmra.mrb[0].mxu0 %v143
    %v231 = vpop.f32.mrb[0].mxu0
    %v232 = vadd.f32 0.0, %v231
    %v233 = vpop.f32.mrb[0].mxu0
    %234 = vdwg.mxu0
    %v235 = vld [vmem:[%s4] sm:$0x1]
    %v236 = vld [vmem:[#allocation3] sm:$0x1]
    %s237 = vtos %v236
    %v238 = vlaneseq
    %v239 = vand.u32 %v238, 127
    %v240 = vld [vmem:[#allocation2] sm:$0xff]
    %v241 = vld [vmem:[#allocation2 + $0x8] sm:$0xff]
    %v243 = vcombine.high %v227, %v227
    %v245 = vunpack.c.l.s4 1966171168
    %v246 = vunpack.c.0.s8 %v245
    %v247 = vlaneseq
    %v248 = vshrl.u32 %v247, 7
    %v249 = vsub.s32 %v246, %v248
    %v250 = vrot.slane %v227, %v249
    %v252 = vunpack.c.l.s4 1966171168
    %v253 = vunpack.c.0.s8 %v252
    %v254 = vlaneseq
    %v255 = vshrl.u32 %v254, 7
    %v256 = vsub.s32 %v253, %v255
    %v257 = vrot.slane %v243, %v256
    %v258 = vcombine.high %v250, %v250
    %v259 = vcombine.high %v257, %v257
    %v261 = vunpack.c.l.s4 1966171168
    %v262 = vunpack.c.0.s8 %v261
    %v263 = vlaneseq
    %v264 = vshrl.u32 %v263, 7
    %v265 = vsub.s32 %v262, %v264
    %v266 = vrot.slane %v250, %v265
    %v268 = vunpack.c.l.s4 1966171168
    %v269 = vunpack.c.0.s8 %v268
    %v270 = vlaneseq
    %v271 = vshrl.u32 %v270, 7
    %v272 = vsub.s32 %v269, %v271
    %v273 = vrot.slane %v257, %v272
    %v275 = vunpack.c.l.s4 1966171168
    %v276 = vunpack.c.0.s8 %v275
    %v277 = vlaneseq
    %v278 = vshrl.u32 %v277, 7
    %v279 = vsub.s32 %v276, %v278
    %v280 = vrot.slane %v258, %v279
    %v282 = vunpack.c.l.s4 1966171168
    %v283 = vunpack.c.0.s8 %v282
    %v284 = vlaneseq
    %v285 = vshrl.u32 %v284, 7
    %v286 = vsub.s32 %v283, %v285
    %v287 = vrot.slane %v259, %v286
    %v288 = vcombine.high %v266, %v266
    %v289 = vcombine.high %v273, %v273
    %v290 = vcombine.high %v280, %v280
    %v291 = vcombine.high %v287, %v287
    %v292 = vlaneseq
    %v293 = vshrl.u32 %v292, 7
    %v294 = vsub.s32 0, %v293
    %v295 = vrot.slane %v266, %v294
    %v296 = vlaneseq
    %v297 = vshrl.u32 %v296, 7
    %v298 = vsub.s32 0, %v297
    %v299 = vrot.slane %v280, %v298
    %v300 = vlaneseq
    %v301 = vshrl.u32 %v300, 7
    %v302 = vsub.s32 0, %v301
    %v303 = vrot.slane %v288, %v302
    %v304 = vlaneseq
    %v305 = vshrl.u32 %v304, 7
    %v306 = vsub.s32 0, %v305
    %v307 = vrot.slane %v290, %v306
    %v308 = vlaneseq
    %v309 = vshrl.u32 %v308, 7
    %v310 = vsub.s32 0, %v309
    %v311 = vrot.slane %v273, %v310
    %v312 = vlaneseq
    %v313 = vshrl.u32 %v312, 7
    %v314 = vsub.s32 0, %v313
    %v315 = vrot.slane %v287, %v314
    %v316 = vlaneseq
    %v317 = vshrl.u32 %v316, 7
    %v318 = vsub.s32 0, %v317
    %v319 = vrot.slane %v289, %v318
    %v320 = vlaneseq
    %v321 = vshrl.u32 %v320, 7
    %v322 = vsub.s32 0, %v321
    %v323 = vrot.slane %v291, %v322
    %v332 = vmul.f32 %v240, %v295
    %v333 = vmul.f32 %v241, %v295
    %v334 = vmul.f32 %v240, %v299
    %v335 = vmul.f32 %v241, %v299
    %v336 = vmul.f32 %v240, %v303
    %v337 = vmul.f32 %v241, %v303
    %v338 = vmul.f32 %v240, %v307
    %v339 = vmul.f32 %v241, %v307
    %v340 = vmul.f32 %v240, %v311
    %v341 = vmul.f32 %v241, %v311
    %v342 = vmul.f32 %v240, %v315
    %v343 = vmul.f32 %v241, %v315
    %v344 = vmul.f32 %v240, %v319
    %v345 = vmul.f32 %v241, %v319
    %v346 = vmul.f32 %v240, %v323
    %v347 = vmul.f32 %v241, %v323
    %v348 = vtanh.pop %v332
    %v349 = vtanh.pop %v333
    %v350 = vtanh.pop %v334
    %v351 = vtanh.pop %v335
    %v352 = vtanh.pop %v336
    %v353 = vtanh.pop %v337
    %v354 = vtanh.pop %v338
    %v355 = vtanh.pop %v339
    %v356 = vtanh.pop %v340
    %v357 = vtanh.pop %v341
    %v358 = vtanh.pop %v342
    %v359 = vtanh.pop %v343
    %v360 = vtanh.pop %v344
    %v361 = vtanh.pop %v345
    %v362 = vtanh.pop %v346
    %v363 = vtanh.pop %v347
    %v365 = vlaneseq
    %v366 = vshrl.u32 %v365, 7
    %v367 = vsub.s32 0, %v366
    %v368 = vrot.slane %v235, %v367
    %v370 = vmul.f32 %v348, %v368
    %v371 = vmul.f32 %v349, %v368
    %v372 = vmul.f32 %v350, %v368
    %v373 = vmul.f32 %v351, %v368
    %v374 = vmul.f32 %v352, %v368
    %v375 = vmul.f32 %v353, %v368
    %v376 = vmul.f32 %v354, %v368
    %v377 = vmul.f32 %v355, %v368
    %v378 = vmul.f32 %v356, %v368
    %v379 = vmul.f32 %v357, %v368
    %v380 = vmul.f32 %v358, %v368
    %v381 = vmul.f32 %v359, %v368
    %v382 = vmul.f32 %v360, %v368
    %v383 = vmul.f32 %v361, %v368
    %v384 = vmul.f32 %v362, %v368
    %v385 = vmul.f32 %v363, %v368
    %386 = vadd.xlane.f32.xlu0 %v370
    %v387 = vpop.xlane.xlu0 %386
    %388 = vadd.xlane.f32.xlu0 %v371
    %v389 = vpop.xlane.xlu0 %388
    %390 = vadd.xlane.f32.xlu0 %v372
    %v391 = vpop.xlane.xlu0 %390
    %392 = vadd.xlane.f32.xlu0 %v373
    %v393 = vpop.xlane.xlu0 %392
    %394 = vadd.xlane.f32.xlu0 %v374
    %v395 = vpop.xlane.xlu0 %394
    %396 = vadd.xlane.f32.xlu0 %v375
    %v397 = vpop.xlane.xlu0 %396
    %398 = vadd.xlane.f32.xlu0 %v376
    %v399 = vpop.xlane.xlu0 %398
    %400 = vadd.xlane.f32.xlu0 %v377
    %v401 = vpop.xlane.xlu0 %400
    %402 = vadd.xlane.f32.xlu0 %v378
    %v403 = vpop.xlane.xlu0 %402
    %404 = vadd.xlane.f32.xlu0 %v379
    %v405 = vpop.xlane.xlu0 %404
    %406 = vadd.xlane.f32.xlu0 %v380
    %v407 = vpop.xlane.xlu0 %406
    %408 = vadd.xlane.f32.xlu0 %v381
    %v409 = vpop.xlane.xlu0 %408
    %410 = vadd.xlane.f32.xlu0 %v382
    %v411 = vpop.xlane.xlu0 %410
    %412 = vadd.xlane.f32.xlu0 %v383
    %v413 = vpop.xlane.xlu0 %412
    %414 = vadd.xlane.f32.xlu0 %v384
    %v415 = vpop.xlane.xlu0 %414
    %416 = vadd.xlane.f32.xlu0 %v385
    %v417 = vpop.xlane.xlu0 %416
    %v418 = vstv %s237
    %v419 = vadd.f32 %v387, %v418
    %v420 = vadd.f32 %v389, %v418
    %v421 = vadd.f32 %v391, %v418
    %v422 = vadd.f32 %v393, %v418
    %v423 = vadd.f32 %v395, %v418
    %v424 = vadd.f32 %v397, %v418
    %v425 = vadd.f32 %v399, %v418
    %v426 = vadd.f32 %v401, %v418
    %v427 = vadd.f32 %v403, %v418
    %v428 = vadd.f32 %v405, %v418
    %v429 = vadd.f32 %v407, %v418
    %v430 = vadd.f32 %v409, %v418
    %v431 = vadd.f32 %v411, %v418
    %v432 = vadd.f32 %v413, %v418
    %v433 = vadd.f32 %v415, %v418
    %v434 = vadd.f32 %v417, %v418
    %vm435 = vcmp.lt.s32.totalorder %v239, 16
    %v452 = vlaneseq
    %v453 = vshrl.u32 %v452, 7
    %v454 = vsub.s32 %v239, %v453
    %v455 = vrot.slane %v419, %v454
    %v456 = vadd.s32 %v239, 4294967288
    %v457 = vlaneseq
    %v458 = vshrl.u32 %v457, 7
    %v459 = vsub.s32 %v456, %v458
    %v460 = vrot.slane %v420, %v459
    %vm461 = vcmask 130112
    %v462 = vsel %vm461, %v460, %v455
    %v463 = vlaneseq
    %v464 = vshrl.u32 %v463, 7
    %v465 = vsub.s32 %v239, %v464
    %v466 = vrot.slane %v421, %v465
    %v467 = vlaneseq
    %v468 = vshrl.u32 %v467, 7
    %v469 = vsub.s32 %v456, %v468
    %v470 = vrot.slane %v422, %v469
    %v471 = vsel %vm461, %v470, %v466
    %v472 = vlaneseq
    %v473 = vshrl.u32 %v472, 7
    %v474 = vsub.s32 %v239, %v473
    %v475 = vrot.slane %v423, %v474
    %v476 = vlaneseq
    %v477 = vshrl.u32 %v476, 7
    %v478 = vsub.s32 %v456, %v477
    %v479 = vrot.slane %v424, %v478
    %v480 = vsel %vm461, %v479, %v475
    %v481 = vlaneseq
    %v482 = vshrl.u32 %v481, 7
    %v483 = vsub.s32 %v239, %v482
    %v484 = vrot.slane %v425, %v483
    %v485 = vlaneseq
    %v486 = vshrl.u32 %v485, 7
    %v487 = vsub.s32 %v456, %v486
    %v488 = vrot.slane %v426, %v487
    %v489 = vsel %vm461, %v488, %v484
    %v490 = vlaneseq
    %v491 = vshrl.u32 %v490, 7
    %v492 = vsub.s32 %v239, %v491
    %v493 = vrot.slane %v427, %v492
    %v494 = vlaneseq
    %v495 = vshrl.u32 %v494, 7
    %v496 = vsub.s32 %v456, %v495
    %v497 = vrot.slane %v428, %v496
    %v498 = vsel %vm461, %v497, %v493
    %v499 = vlaneseq
    %v500 = vshrl.u32 %v499, 7
    %v501 = vsub.s32 %v239, %v500
    %v502 = vrot.slane %v429, %v501
    %v503 = vlaneseq
    %v504 = vshrl.u32 %v503, 7
    %v505 = vsub.s32 %v456, %v504
    %v506 = vrot.slane %v430, %v505
    %v507 = vsel %vm461, %v506, %v502
    %v508 = vlaneseq
    %v509 = vshrl.u32 %v508, 7
    %v510 = vsub.s32 %v239, %v509
    %v511 = vrot.slane %v431, %v510
    %v512 = vlaneseq
    %v513 = vshrl.u32 %v512, 7
    %v514 = vsub.s32 %v456, %v513
    %v515 = vrot.slane %v432, %v514
    %v516 = vsel %vm461, %v515, %v511
    %v517 = vlaneseq
    %v518 = vshrl.u32 %v517, 7
    %v519 = vsub.s32 %v239, %v518
    %v520 = vrot.slane %v433, %v519
    %v521 = vlaneseq
    %v522 = vshrl.u32 %v521, 7
    %v523 = vsub.s32 %v456, %v522
    %v524 = vrot.slane %v434, %v523
    %v525 = vsel %vm461, %v524, %v520
    %vm526 = vcmask 1041409
    %v527 = vsel %vm526, %v471, %v462
    %vm528 = vcmask 1042434
    %v529 = vsel %vm528, %v480, %v527
    %vm530 = vcmask 1043459
    %v531 = vsel %vm530, %v489, %v529
    %vm532 = vcmask 1044484
    %v533 = vsel %vm532, %v498, %v531
    %vm534 = vcmask 1045509
    %v535 = vsel %vm534, %v507, %v533
    %vm536 = vcmask 1046534
    %v537 = vsel %vm536, %v516, %v535
    %vm538 = vcmask 1047559
    %v539 = vsel %vm538, %v525, %v537
    %v541 = vsel %vm435, %v539, -1e+30
    %vm542 = vcmask 130048
    %v543 = vsel %vm542, %v541, -inf
    %544 = vmax.xlane.f32.xlu0 %v543
    %v545 = vpop.xlane.xlu0 %544
    %v546 = vsub.f32 %v541, %v545
    %v547 = vmul.f32 %v546, 1.442695
    %v548 = vpow.pop %v547
    %v549 = vsel %vm542, %v548, 0.0
    %550 = vadd.xlane.f32.xlu0 %v549
    %v551 = vpop.xlane.xlu0 %550
    %v552 = vrcp.pop %v551
    %v553 = vmul.f32 %v548, %v552
    %554 = vst.msk [vmem:[#allocation6] sm:$0xff] %vm542, %v553
    %v555 = vld [vmem:[%s0] sm:$0xff]
    %v556 = vld [vmem:[%s0 + $0x8] sm:$0xff]
    %v558 = vsel %vm542, %v553, 0
    %560 = vmatprep.subr.mxu0 0.0
    %561 = vmatpush1.msra.mxu0 %v555
    %562 = vmatprep.subr.mxu0 0.0
    %563 = vmatpush1.msra.mxu0 %v556
    %564 = vmatprep.subr.mxu0 0.0
    %565 = vmatpush1.msra.mxu0 0.0
    %566 = vmatprep.subr.mxu0 0.0
    %567 = vmatpush1.msra.mxu0 0.0
    %568 = vmatprep.subr.mxu0 0.0
    %569 = vmatpush1.msra.mxu0 0.0
    %570 = vmatprep.subr.mxu0 0.0
    %571 = vmatpush1.msra.mxu0 0.0
    %572 = vmatprep.subr.mxu0 0.0
    %573 = vmatpush1.msra.mxu0 0.0
    %574 = vmatprep.subr.mxu0 0.0
    %575 = vmatpush1.msra.mxu0 0.0
    %576 = vmatprep.subr.mxu0 0.0
    %577 = vmatpush1.msra.mxu0 0.0
    %578 = vmatprep.subr.mxu0 0.0
    %579 = vmatpush1.msra.mxu0 0.0
    %580 = vmatprep.subr.mxu0 0.0
    %581 = vmatpush1.msra.mxu0 0.0
    %582 = vmatprep.subr.mxu0 0.0
    %583 = vmatpush1.msra.mxu0 0.0
    %584 = vmatprep.subr.mxu0 0.0
    %585 = vmatpush1.msra.mxu0 0.0
    %586 = vmatprep.subr.mxu0 0.0
    %587 = vmatpush1.msra.mxu0 0.0
    %588 = vmatprep.subr.mxu0 0.0
    %589 = vmatpush1.msra.mxu0 0.0
    %590 = vmatprep.subr.mxu0 0.0
    %591 = vmatpush1.msra.mxu0 0.0
    %592 = vmatprep.subr.mxu0 0.0
    %593 = vmatpush1.msra.mxu0 0.0
    %594 = vmatprep.subr.mxu0 0.0
    %595 = vmatpush1.msra.mxu0 0.0
    %596 = vmatprep.subr.mxu0 0.0
    %597 = vmatpush1.msra.mxu0 0.0
    %598 = vmatprep.subr.mxu0 0.0
    %599 = vmatpush1.msra.mxu0 0.0
    %600 = vmatprep.subr.mxu0 0.0
    %601 = vmatpush1.msra.mxu0 0.0
    %602 = vmatprep.subr.mxu0 0.0
    %603 = vmatpush1.msra.mxu0 0.0
    %604 = vmatprep.subr.mxu0 0.0
    %605 = vmatpush1.msra.mxu0 0.0
    %606 = vmatprep.subr.mxu0 0.0
    %607 = vmatpush1.msra.mxu0 0.0
    %608 = vmatprep.subr.mxu0 0.0
    %609 = vmatpush1.msra.mxu0 0.0
    %610 = vmatprep.subr.mxu0 0.0
    %611 = vmatpush1.msra.mxu0 0.0
    %612 = vmatprep.subr.mxu0 0.0
    %613 = vmatpush1.msra.mxu0 0.0
    %614 = vmatprep.subr.mxu0 0.0
    %615 = vmatpush1.msra.mxu0 0.0
    %616 = vmatprep.subr.mxu0 0.0
    %617 = vmatpush1.msra.mxu0 0.0
    %618 = vmatprep.subr.mxu0 0.0
    %619 = vmatpush1.msra.mxu0 0.0
    %620 = vmatprep.subr.mxu0 0.0
    %621 = vmatpush1.msra.mxu0 0.0
    %622 = vmatprep.subr.mxu0 0.0
    %623 = vmatpush1.msra.mxu0 0.0
    %624 = vmatprep.mubr.f32.mxu0 0.0
    %625 = vmatmul.mubr.f32.gmra.mrb[0].mxu0 %v558
    %v626 = vpop.f32.mrb[0].mxu0
    %v627 = vadd.f32 0.0, %v626
    %v628 = vpop.f32.mrb[0].mxu0
    %629 = vdwg.mxu0
    %630 = vst [vmem:[#allocation4] sm:$0xff] %v627
    %s631 = scalar_lea.vmem [#allocation2], 16
    %v632 = vld [vmem:[%s631] sm:$0xff]
    %v633 = vld [vmem:[%s631 + $0x8] sm:$0xff]
    %v635 = vcombine.high %v232, %v232
    %v637 = vunpack.c.l.s4 1966171168
    %v638 = vunpack.c.0.s8 %v637
    %v639 = vlaneseq
    %v640 = vshrl.u32 %v639, 7
    %v641 = vsub.s32 %v638, %v640
    %v642 = vrot.slane %v232, %v641
    %v644 = vunpack.c.l.s4 1966171168
    %v645 = vunpack.c.0.s8 %v644
    %v646 = vlaneseq
    %v647 = vshrl.u32 %v646, 7
    %v648 = vsub.s32 %v645, %v647
    %v649 = vrot.slane %v635, %v648
    %v650 = vcombine.high %v642, %v642
    %v651 = vcombine.high %v649, %v649
    %v653 = vunpack.c.l.s4 1966171168
    %v654 = vunpack.c.0.s8 %v653
    %v655 = vlaneseq
    %v656 = vshrl.u32 %v655, 7
    %v657 = vsub.s32 %v654, %v656
    %v658 = vrot.slane %v642, %v657
    %v660 = vunpack.c.l.s4 1966171168
    %v661 = vunpack.c.0.s8 %v660
    %v662 = vlaneseq
    %v663 = vshrl.u32 %v662, 7
    %v664 = vsub.s32 %v661, %v663
    %v665 = vrot.slane %v649, %v664
    %v667 = vunpack.c.l.s4 1966171168
    %v668 = vunpack.c.0.s8 %v667
    %v669 = vlaneseq
    %v670 = vshrl.u32 %v669, 7
    %v671 = vsub.s32 %v668, %v670
    %v672 = vrot.slane %v650, %v671
    %v674 = vunpack.c.l.s4 1966171168
    %v675 = vunpack.c.0.s8 %v674
    %v676 = vlaneseq
    %v677 = vshrl.u32 %v676, 7
    %v678 = vsub.s32 %v675, %v677
    %v679 = vrot.slane %v651, %v678
    %v680 = vcombine.high %v658, %v658
    %v681 = vcombine.high %v665, %v665
    %v682 = vcombine.high %v672, %v672
    %v683 = vcombine.high %v679, %v679
    %v684 = vlaneseq
    %v685 = vshrl.u32 %v684, 7
    %v686 = vsub.s32 0, %v685
    %v687 = vrot.slane %v658, %v686
    %v688 = vlaneseq
    %v689 = vshrl.u32 %v688, 7
    %v690 = vsub.s32 0, %v689
    %v691 = vrot.slane %v672, %v690
    %v692 = vlaneseq
    %v693 = vshrl.u32 %v692, 7
    %v694 = vsub.s32 0, %v693
    %v695 = vrot.slane %v680, %v694
    %v696 = vlaneseq
    %v697 = vshrl.u32 %v696, 7
    %v698 = vsub.s32 0, %v697
    %v699 = vrot.slane %v682, %v698
    %v700 = vlaneseq
    %v701 = vshrl.u32 %v700, 7
    %v702 = vsub.s32 0, %v701
    %v703 = vrot.slane %v665, %v702
    %v704 = vlaneseq
    %v705 = vshrl.u32 %v704, 7
    %v706 = vsub.s32 0, %v705
    %v707 = vrot.slane %v679, %v706
    %v708 = vlaneseq
    %v709 = vshrl.u32 %v708, 7
    %v710 = vsub.s32 0, %v709
    %v711 = vrot.slane %v681, %v710
    %v712 = vlaneseq
    %v713 = vshrl.u32 %v712, 7
    %v714 = vsub.s32 0, %v713
    %v715 = vrot.slane %v683, %v714
    %v724 = vmul.f32 %v632, %v687
    %v725 = vmul.f32 %v633, %v687
    %v726 = vmul.f32 %v632, %v691
    %v727 = vmul.f32 %v633, %v691
    %v728 = vmul.f32 %v632, %v695
    %v729 = vmul.f32 %v633, %v695
    %v730 = vmul.f32 %v632, %v699
    %v731 = vmul.f32 %v633, %v699
    %v732 = vmul.f32 %v632, %v703
    %v733 = vmul.f32 %v633, %v703
    %v734 = vmul.f32 %v632, %v707
    %v735 = vmul.f32 %v633, %v707
    %v736 = vmul.f32 %v632, %v711
    %v737 = vmul.f32 %v633, %v711
    %v738 = vmul.f32 %v632, %v715
    %v739 = vmul.f32 %v633, %v715
    %v740 = vtanh.pop %v724
    %v741 = vtanh.pop %v725
    %v742 = vtanh.pop %v726
    %v743 = vtanh.pop %v727
    %v744 = vtanh.pop %v728
    %v745 = vtanh.pop %v729
    %v746 = vtanh.pop %v730
    %v747 = vtanh.pop %v731
    %v748 = vtanh.pop %v732
    %v749 = vtanh.pop %v733
    %v750 = vtanh.pop %v734
    %v751 = vtanh.pop %v735
    %v752 = vtanh.pop %v736
    %v753 = vtanh.pop %v737
    %v754 = vtanh.pop %v738
    %v755 = vtanh.pop %v739
    %v756 = vmul.f32 %v740, %v368
    %v757 = vmul.f32 %v741, %v368
    %v758 = vmul.f32 %v742, %v368
    %v759 = vmul.f32 %v743, %v368
    %v760 = vmul.f32 %v744, %v368
    %v761 = vmul.f32 %v745, %v368
    %v762 = vmul.f32 %v746, %v368
    %v763 = vmul.f32 %v747, %v368
    %v764 = vmul.f32 %v748, %v368
    %v765 = vmul.f32 %v749, %v368
    %v766 = vmul.f32 %v750, %v368
    %v767 = vmul.f32 %v751, %v368
    %v768 = vmul.f32 %v752, %v368
    %v769 = vmul.f32 %v753, %v368
    %v770 = vmul.f32 %v754, %v368
    %v771 = vmul.f32 %v755, %v368
    %772 = vadd.xlane.f32.xlu0 %v756
    %v773 = vpop.xlane.xlu0 %772
    %774 = vadd.xlane.f32.xlu0 %v757
    %v775 = vpop.xlane.xlu0 %774
    %776 = vadd.xlane.f32.xlu0 %v758
    %v777 = vpop.xlane.xlu0 %776
    %778 = vadd.xlane.f32.xlu0 %v759
    %v779 = vpop.xlane.xlu0 %778
    %780 = vadd.xlane.f32.xlu0 %v760
    %v781 = vpop.xlane.xlu0 %780
    %782 = vadd.xlane.f32.xlu0 %v761
    %v783 = vpop.xlane.xlu0 %782
    %784 = vadd.xlane.f32.xlu0 %v762
    %v785 = vpop.xlane.xlu0 %784
    %786 = vadd.xlane.f32.xlu0 %v763
    %v787 = vpop.xlane.xlu0 %786
    %788 = vadd.xlane.f32.xlu0 %v764
    %v789 = vpop.xlane.xlu0 %788
    %790 = vadd.xlane.f32.xlu0 %v765
    %v791 = vpop.xlane.xlu0 %790
    %792 = vadd.xlane.f32.xlu0 %v766
    %v793 = vpop.xlane.xlu0 %792
    %794 = vadd.xlane.f32.xlu0 %v767
    %v795 = vpop.xlane.xlu0 %794
    %796 = vadd.xlane.f32.xlu0 %v768
    %v797 = vpop.xlane.xlu0 %796
    %798 = vadd.xlane.f32.xlu0 %v769
    %v799 = vpop.xlane.xlu0 %798
    %800 = vadd.xlane.f32.xlu0 %v770
    %v801 = vpop.xlane.xlu0 %800
    %802 = vadd.xlane.f32.xlu0 %v771
    %v803 = vpop.xlane.xlu0 %802
    %v804 = vadd.f32 %v773, %v418
    %v805 = vadd.f32 %v775, %v418
    %v806 = vadd.f32 %v777, %v418
    %v807 = vadd.f32 %v779, %v418
    %v808 = vadd.f32 %v781, %v418
    %v809 = vadd.f32 %v783, %v418
    %v810 = vadd.f32 %v785, %v418
    %v811 = vadd.f32 %v787, %v418
    %v812 = vadd.f32 %v789, %v418
    %v813 = vadd.f32 %v791, %v418
    %v814 = vadd.f32 %v793, %v418
    %v815 = vadd.f32 %v795, %v418
    %v816 = vadd.f32 %v797, %v418
    %v817 = vadd.f32 %v799, %v418
    %v818 = vadd.f32 %v801, %v418
    %v819 = vadd.f32 %v803, %v418
    %v836 = vlaneseq
    %v837 = vshrl.u32 %v836, 7
    %v838 = vsub.s32 %v239, %v837
    %v839 = vrot.slane %v804, %v838
    %v840 = vlaneseq
    %v841 = vshrl.u32 %v840, 7
    %v842 = vsub.s32 %v456, %v841
    %v843 = vrot.slane %v805, %v842
    %v844 = vsel %vm461, %v843, %v839
    %v845 = vlaneseq
    %v846 = vshrl.u32 %v845, 7
    %v847 = vsub.s32 %v239, %v846
    %v848 = vrot.slane %v806, %v847
    %v849 = vlaneseq
    %v850 = vshrl.u32 %v849, 7
    %v851 = vsub.s32 %v456, %v850
    %v852 = vrot.slane %v807, %v851
    %v853 = vsel %vm461, %v852, %v848
    %v854 = vlaneseq
    %v855 = vshrl.u32 %v854, 7
    %v856 = vsub.s32 %v239, %v855
    %v857 = vrot.slane %v808, %v856
    %v858 = vlaneseq
    %v859 = vshrl.u32 %v858, 7
    %v860 = vsub.s32 %v456, %v859
    %v861 = vrot.slane %v809, %v860
    %v862 = vsel %vm461, %v861, %v857
    %v863 = vlaneseq
    %v864 = vshrl.u32 %v863, 7
    %v865 = vsub.s32 %v239, %v864
    %v866 = vrot.slane %v810, %v865
    %v867 = vlaneseq
    %v868 = vshrl.u32 %v867, 7
    %v869 = vsub.s32 %v456, %v868
    %v870 = vrot.slane %v811, %v869
    %v871 = vsel %vm461, %v870, %v866
    %v872 = vlaneseq
    %v873 = vshrl.u32 %v872, 7
    %v874 = vsub.s32 %v239, %v873
    %v875 = vrot.slane %v812, %v874
    %v876 = vlaneseq
    %v877 = vshrl.u32 %v876, 7
    %v878 = vsub.s32 %v456, %v877
    %v879 = vrot.slane %v813, %v878
    %v880 = vsel %vm461, %v879, %v875
    %v881 = vlaneseq
    %v882 = vshrl.u32 %v881, 7
    %v883 = vsub.s32 %v239, %v882
    %v884 = vrot.slane %v814, %v883
    %v885 = vlaneseq
    %v886 = vshrl.u32 %v885, 7
    %v887 = vsub.s32 %v456, %v886
    %v888 = vrot.slane %v815, %v887
    %v889 = vsel %vm461, %v888, %v884
    %v890 = vlaneseq
    %v891 = vshrl.u32 %v890, 7
    %v892 = vsub.s32 %v239, %v891
    %v893 = vrot.slane %v816, %v892
    %v894 = vlaneseq
    %v895 = vshrl.u32 %v894, 7
    %v896 = vsub.s32 %v456, %v895
    %v897 = vrot.slane %v817, %v896
    %v898 = vsel %vm461, %v897, %v893
    %v899 = vlaneseq
    %v900 = vshrl.u32 %v899, 7
    %v901 = vsub.s32 %v239, %v900
    %v902 = vrot.slane %v818, %v901
    %v903 = vlaneseq
    %v904 = vshrl.u32 %v903, 7
    %v905 = vsub.s32 %v456, %v904
    %v906 = vrot.slane %v819, %v905
    %v907 = vsel %vm461, %v906, %v902
    %v908 = vsel %vm526, %v853, %v844
    %v909 = vsel %vm528, %v862, %v908
    %v910 = vsel %vm530, %v871, %v909
    %v911 = vsel %vm532, %v880, %v910
    %v912 = vsel %vm534, %v889, %v911
    %v913 = vsel %vm536, %v898, %v912
    %v914 = vsel %vm538, %v907, %v913
    %v916 = vsel %vm435, %v914, -1e+30
    %v917 = vsel %vm542, %v916, -inf
    %918 = vmax.xlane.f32.xlu0 %v917
    %v919 = vpop.xlane.xlu0 %918
    %v920 = vsub.f32 %v916, %v919
    %v921 = vmul.f32 %v920, 1.442695
    %v922 = vpow.pop %v921
    %v923 = vsel %vm542, %v922, 0.0
    %924 = vadd.xlane.f32.xlu0 %v923
    %v925 = vpop.xlane.xlu0 %924
    %v926 = vrcp.pop %v925
    %v927 = vmul.f32 %v922, %v926
    %s928 = scalar_lea.vmem [#allocation6], 8
    %929 = vst.msk [vmem:[%s928] sm:$0xff] %vm542, %v927
    %s930 = scalar_lea.vmem %s0, 16
    %v931 = vld [vmem:[%s930] sm:$0xff]
    %v932 = vld [vmem:[%s930 + $0x8] sm:$0xff]
    %v934 = vsel %vm542, %v927, 0
    %936 = vmatprep.subr.mxu0 0.0
    %937 = vmatpush1.msra.mxu0 %v931
    %938 = vmatprep.subr.mxu0 0.0
    %939 = vmatpush1.msra.mxu0 %v932
    %940 = vmatprep.subr.mxu0 0.0
    %941 = vmatpush1.msra.mxu0 0.0
    %942 = vmatprep.subr.mxu0 0.0
    %943 = vmatpush1.msra.mxu0 0.0
    %944 = vmatprep.subr.mxu0 0.0
    %945 = vmatpush1.msra.mxu0 0.0
    %946 = vmatprep.subr.mxu0 0.0
    %947 = vmatpush1.msra.mxu0 0.0
    %948 = vmatprep.subr.mxu0 0.0
    %949 = vmatpush1.msra.mxu0 0.0
    %950 = vmatprep.subr.mxu0 0.0
    %951 = vmatpush1.msra.mxu0 0.0
    %952 = vmatprep.subr.mxu0 0.0
    %953 = vmatpush1.msra.mxu0 0.0
    %954 = vmatprep.subr.mxu0 0.0
    %955 = vmatpush1.msra.mxu0 0.0
    %956 = vmatprep.subr.mxu0 0.0
    %957 = vmatpush1.msra.mxu0 0.0
    %958 = vmatprep.subr.mxu0 0.0
    %959 = vmatpush1.msra.mxu0 0.0
    %960 = vmatprep.subr.mxu0 0.0
    %961 = vmatpush1.msra.mxu0 0.0
    %962 = vmatprep.subr.mxu0 0.0
    %963 = vmatpush1.msra.mxu0 0.0
    %964 = vmatprep.subr.mxu0 0.0
    %965 = vmatpush1.msra.mxu0 0.0
    %966 = vmatprep.subr.mxu0 0.0
    %967 = vmatpush1.msra.mxu0 0.0
    %968 = vmatprep.subr.mxu0 0.0
    %969 = vmatpush1.msra.mxu0 0.0
    %970 = vmatprep.subr.mxu0 0.0
    %971 = vmatpush1.msra.mxu0 0.0
    %972 = vmatprep.subr.mxu0 0.0
    %973 = vmatpush1.msra.mxu0 0.0
    %974 = vmatprep.subr.mxu0 0.0
    %975 = vmatpush1.msra.mxu0 0.0
    %976 = vmatprep.subr.mxu0 0.0
    %977 = vmatpush1.msra.mxu0 0.0
    %978 = vmatprep.subr.mxu0 0.0
    %979 = vmatpush1.msra.mxu0 0.0
    %980 = vmatprep.subr.mxu0 0.0
    %981 = vmatpush1.msra.mxu0 0.0
    %982 = vmatprep.subr.mxu0 0.0
    %983 = vmatpush1.msra.mxu0 0.0
    %984 = vmatprep.subr.mxu0 0.0
    %985 = vmatpush1.msra.mxu0 0.0
    %986 = vmatprep.subr.mxu0 0.0
    %987 = vmatpush1.msra.mxu0 0.0
    %988 = vmatprep.subr.mxu0 0.0
    %989 = vmatpush1.msra.mxu0 0.0
    %990 = vmatprep.subr.mxu0 0.0
    %991 = vmatpush1.msra.mxu0 0.0
    %992 = vmatprep.subr.mxu0 0.0
    %993 = vmatpush1.msra.mxu0 0.0
    %994 = vmatprep.subr.mxu0 0.0
    %995 = vmatpush1.msra.mxu0 0.0
    %996 = vmatprep.subr.mxu0 0.0
    %997 = vmatpush1.msra.mxu0 0.0
    %998 = vmatprep.subr.mxu0 0.0
    %999 = vmatpush1.msra.mxu0 0.0
    %1000 = vmatprep.mubr.f32.mxu0 0.0
    %1001 = vmatmul.mubr.f32.gmra.mrb[0].mxu0 %v934
    %v1002 = vpop.f32.mrb[0].mxu0
    %v1003 = vadd.f32 0.0, %v1002
    %v1004 = vpop.f32.mrb[0].mxu0
    %1005 = vdwg.mxu0
    %s1006 = scalar_lea.vmem [#allocation4], 8
    %1007 = vst [vmem:[%s1006] sm:$0xff] %v1003
    // Predicated region
    $region30: #{low_rank_bilinear_attention.1} parent=1 // pred_check
      _
    $region31: #{low_rank_bilinear_attention.1} parent=1 // pred_check_branch
      %1009 = sbr.rel (0) target = $region33
    $region32: #{low_rank_bilinear_attention.1} parent=1 // pred_region
      %s1011 = ssub.s32 256, 256
      %1012 = vsyncadd [#allocation5], %s1011
      %s1013 = sshll.u32 [#allocation4], 4
      %s1014 = int_to_ptr.vmem [resolvable:$true] %s1013
      %1019 = dma.vmem_to_hbm [thread:$0]  %s1014, 256, %s6, [#allocation5], 128, 128, 8
    $region33: #{low_rank_bilinear_attention.1} parent=1 // pred_fallthru
      _
    // Predicated region
    $region34: #{low_rank_bilinear_attention.1} parent=1 // pred_check
      _
    $region35: #{low_rank_bilinear_attention.1} parent=1 // pred_check_branch
      %1021 = sbr.rel (0) target = $region37
    $region36: #{low_rank_bilinear_attention.1} parent=1 // pred_region
      %s1023 = ssub.s32 256, 256
      %1024 = vsyncadd [#allocation7], %s1023
      %s1025 = sshll.u32 [#allocation6], 4
      %s1026 = int_to_ptr.vmem [resolvable:$true] %s1025
      %1031 = dma.vmem_to_hbm [thread:$0]  %s1026, 256, %s7, [#allocation7], 128, 128, 8
    $region37: #{low_rank_bilinear_attention.1} parent=1 // pred_fallthru
      _
    // Predicated region
    $region38: #{low_rank_bilinear_attention.1} parent=1 // pred_check
      _
    $region39: #{low_rank_bilinear_attention.1} parent=1 // pred_check_branch
      %1033 = sbr.rel (0) target = $region41
    $region40: #{low_rank_bilinear_attention.1} parent=1 // pred_region
      %1034 = dma.done [#allocation5], 256
    $region41: #{low_rank_bilinear_attention.1} parent=1 // pred_fallthru
      _
    // Predicated region
    $region42: #{low_rank_bilinear_attention.1} parent=1 // pred_check
      _
    $region43: #{low_rank_bilinear_attention.1} parent=1 // pred_check_branch
      %1036 = sbr.rel (0) target = $region45
    $region44: #{low_rank_bilinear_attention.1} parent=1 // pred_region
      %1037 = dma.done [#allocation7], 256
    $region45: #{low_rank_bilinear_attention.1} parent=1 // pred_fallthru
      _
    %1038 = vsyncpa [#allocation5], 1
    %1039 = vsyncpa [#allocation7], 1

</llo_original>
